<compile_context>
chip_gen: v5e
topology: v5e:2x2
jax: 0.10.0
libtpu: 0.0.40
codegen_flags: <defaults>
</compile_context>

<pallas_src>
import functools

import numpy as np
import jax
import jax.numpy as jnp
from jax.experimental import pallas as pl
from jax.experimental.pallas import tpu as pltpu


def _tcff_kernel(*refs, eps, has_time):
    if has_time:
        (x_ref, sp1_ref, sh_ref, gamma_ref, beta_ref,
         w_in_ref, b_in_ref, w_out_ref, b_out_ref,
         o_ref, xn_scr, acc_scr) = refs
    else:
        (x_ref, gamma_ref, beta_ref,
         w_in_ref, b_in_ref, w_out_ref, b_out_ref,
         o_ref, xn_scr, acc_scr) = refs

    ki = pl.program_id(2)

    # --- once per (batch, row-tile): LayerNorm, cached in bf16 VMEM scratch.
    @pl.when(ki == 0)
    def _():
        x = x_ref[0].astype(jnp.float32)                         # (TN, dim)
        mean = jnp.mean(x, axis=-1, keepdims=True)
        xc = x - mean
        var = jnp.mean(xc * xc, axis=-1, keepdims=True)
        xn = xc * jax.lax.rsqrt(var + eps)
        xn = xn * gamma_ref[...] + beta_ref[...]                 # gamma/beta: (1, dim)
        xn_scr[...] = xn.astype(xn_scr.dtype)

    # --- per inner tile: linear_in slice + SiLU + time scale/shift + partial linear_out.
    h = jnp.dot(xn_scr[...], w_in_ref[...],
                preferred_element_type=jnp.float32) + b_in_ref[...]   # (TN, TI) f32
    h = h * jax.nn.sigmoid(h)                                         # SiLU
    if has_time:
        h = h * sp1_ref[0] + sh_ref[0]                                # x*(scale+1)+shift
    # TODO(synk): dropout (p=0.1) implemented only as eval-mode identity (no RNG mask).
    partial = jnp.dot(h.astype(w_out_ref.dtype), w_out_ref[...],
                      preferred_element_type=jnp.float32)             # (TN, dim_out) f32

    @pl.when(ki == 0)
    def _():
        acc_scr[...] = partial

    @pl.when(ki > 0)
    def _():
        acc_scr[...] += partial

    # --- last inner tile: add bias, store the output row tile.
    @pl.when(ki == pl.num_programs(2) - 1)
    def _():
        o_ref[0] = (acc_scr[...] + b_out_ref[...]).astype(o_ref.dtype)


def _pick_tile(total, target, align):
    """Largest multiple of `align` that divides `total` and is <= target; else full."""
    if total <= target:
        return total
    t = max((target // align) * align, align)
    while t > 0 and total % t != 0:
        t -= align
    return t if t > 0 else total


def time_cond_feedforward(x, time, params, *, eps=1e-5,
                          row_tile=256, inner_tile=512,
                          compute_dtype=jnp.bfloat16):
    """x: (B, N, dim), time: (B, 1, time_cond_dim) or None -> (B, N, dim_out)."""
    B, N, dim = x.shape
    w_in = params["w_in"]            # (dim, inner)
    w_out = params["w_out"]          # (inner, dim_out)
    inner = w_in.shape[1]
    dim_out = w_out.shape[1]
    has_time = time is not None

    # --- hoisted time conditioning: an M=1 matmul, done once in plain JAX.
    if has_time:
        ts = time.astype(jnp.float32)
        ts = ts * jax.nn.sigmoid(ts)                               # SiLU(time)
        sc_sh = jnp.dot(ts, params["w_tc"],
                        preferred_element_type=jnp.float32) + params["b_tc"]
        scale_p1 = sc_sh[..., :inner] + 1.0                        # (B, 1, inner)
        shift = sc_sh[..., inner:]                                 # (B, 1, inner)

    gamma = params["gamma"].reshape(1, dim).astype(jnp.float32)
    beta = params["beta"].reshape(1, dim).astype(jnp.float32)
    b_in = params["b_in"].reshape(1, inner).astype(jnp.float32)
    b_out = params["b_out"].reshape(1, dim_out).astype(jnp.float32)
    w_in_c = w_in.astype(compute_dtype)
    w_out_c = w_out.astype(compute_dtype)

    tn = _pick_tile(N, row_tile, 8)            # rows per step (MXU wants >=128 rows)
    ti = _pick_tile(inner, inner_tile, 128)    # hidden-dim tile (reduction axis)
    grid = (B, N // tn, inner // ti)

    # VMEM budget: double-buffered tiles + scratch, with headroom.
    xb = x.dtype.itemsize
    cb = np.dtype(compute_dtype).itemsize
    est = (2 * tn * dim * xb                      # x tile
           + 2 * tn * dim_out * xb                # out tile
           + 2 * (dim * ti + ti * dim_out) * cb   # w_in / w_out tiles
           + 2 * 3 * ti * 4                       # scale+1 / shift / b_in tiles
           + 2 * (2 * dim + dim_out) * 4          # gamma / beta / b_out
           + tn * dim * cb + tn * dim_out * 4)    # xn + acc scratch
    vmem_limit = int(min(max(3 * est, 32 * 1024 * 1024), 100 * 1024 * 1024))

    kernel = functools.partial(_tcff_kernel, eps=eps, has_time=has_time)

    in_specs = [pl.BlockSpec((1, tn, dim), lambda b, n, k: (b, n, 0))]   # x
    inputs = [x]
    if has_time:
        in_specs += [
            pl.BlockSpec((1, 1, ti), lambda b, n, k: (b, 0, k)),          # scale + 1
            pl.BlockSpec((1, 1, ti), lambda b, n, k: (b, 0, k)),          # shift
        ]
        inputs += [scale_p1, shift]
    in_specs += [
        pl.BlockSpec((1, dim), lambda b, n, k: (0, 0)),                   # gamma
        pl.BlockSpec((1, dim), lambda b, n, k: (0, 0)),                   # beta
        pl.BlockSpec((dim, ti), lambda b, n, k: (0, k)),                  # w_in
        pl.BlockSpec((1, ti), lambda b, n, k: (0, k)),                    # b_in
        pl.BlockSpec((ti, dim_out), lambda b, n, k: (k, 0)),              # w_out
        pl.BlockSpec((1, dim_out), lambda b, n, k: (0, 0)),               # b_out
    ]
    inputs += [gamma, beta, w_in_c, b_in, w_out_c, b_out]

    return pl.pallas_call(
        kernel,
        out_shape=jax.ShapeDtypeStruct((B, N, dim_out), x.dtype),
        grid_spec=pltpu.PrefetchScalarGridSpec(
            num_scalar_prefetch=0,
            grid=grid,
            in_specs=in_specs,
            out_specs=pl.BlockSpec((1, tn, dim_out), lambda b, n, k: (b, n, 0)),
            scratch_shapes=[
                pltpu.VMEM((tn, dim), compute_dtype),      # LayerNorm cache (bf16)
                pltpu.VMEM((tn, dim_out), jnp.float32),    # output accumulator
            ],
        ),
        compiler_params=pltpu.CompilerParams(
            dimension_semantics=("parallel", "parallel", "arbitrary"),
            vmem_limit_bytes=vmem_limit,
        ),
    )(*inputs)


def reference(x, time, params, eps=1e-5, compute_dtype=jnp.bfloat16):
    """Pure-JAX reference mirroring the PyTorch forward (same bf16 matmul casts)."""
    mean = jnp.mean(x, axis=-1, keepdims=True)
    var = jnp.mean((x - mean) ** 2, axis=-1, keepdims=True)
    xn = (x - mean) * jax.lax.rsqrt(var + eps) * params["gamma"] + params["beta"]
    h = jnp.dot(xn.astype(compute_dtype), params["w_in"].astype(compute_dtype),
                preferred_element_type=jnp.float32) + params["b_in"]
    h = h * jax.nn.sigmoid(h)
    if time is not None:
        ts = time * jax.nn.sigmoid(time)
        sc_sh = ts @ params["w_tc"] + params["b_tc"]
        inner = params["w_in"].shape[1]
        scale, shift = sc_sh[..., :inner], sc_sh[..., inner:]
        h = h * (scale + 1.0) + shift
    out = jnp.dot(h.astype(compute_dtype), params["w_out"].astype(compute_dtype),
                  preferred_element_type=jnp.float32) + params["b_out"]
    return out.astype(x.dtype)


if __name__ == "__main__":
    # Small shapes: batch=2, seq=8, dim=32, mult=4 -> inner=128, time_cond_dim=16
    B, N, dim, mult, tcd = 2, 8, 32, 4, 16
    inner = dim * mult
    dim_out = dim

    key = jax.random.PRNGKey(0)
    ks = jax.random.split(key, 8)

    # Random (non-zero-init) parameters so the kernel exercises real compute.
    params = {
        "gamma": jnp.ones((dim,), jnp.float32),
        "beta": jnp.zeros((dim,), jnp.float32),
        "w_in": jax.random.normal(ks[0], (dim, inner), jnp.float32) * 0.05,
        "b_in": jax.random.normal(ks[1], (inner,), jnp.float32) * 0.05,
        "w_tc": jax.random.normal(ks[2], (tcd, 2 * inner), jnp.float32) * 0.05,
        "b_tc": jax.random.normal(ks[3], (2 * inner,), jnp.float32) * 0.05,
        "w_out": jax.random.normal(ks[4], (inner, dim_out), jnp.float32) * 0.05,
        "b_out": jax.random.normal(ks[5], (dim_out,), jnp.float32) * 0.05,
    }

    x = jax.random.normal(ks[6], (B, N, dim), jnp.float32)
    time = jax.random.normal(ks[7], (B, 1, tcd), jnp.float32)

    # Path with time conditioning.
    out = jax.block_until_ready(time_cond_feedforward(x, time, params))
    ref = jax.block_until_ready(reference(x, time, params))
    assert out.shape == (B, N, dim_out)
    assert jnp.allclose(out, ref, atol=1e-2, rtol=1e-2), "mismatch vs reference (time)"

    # Path without time conditioning (scale/shift statically elided).
    out_nt = jax.block_until_ready(time_cond_feedforward(x, None, params))
    ref_nt = jax.block_until_ready(reference(x, None, params))
    assert jnp.allclose(out_nt, ref_nt, atol=1e-2, rtol=1e-2), "mismatch vs reference (no time)"

    print("KERNEL_OK")
</pallas_src>

<mosaic_0001>
module attributes {stable_mosaic.version = 11 : i64} {
  func.func @_tcff_kernel(%arg0: i32, %arg1: i32, %arg2: i32, %arg3: memref<1x8x32xf32, #tpu.memory_space<vmem>>, %arg4: memref<1x1x128xf32, #tpu.memory_space<vmem>>, %arg5: memref<1x1x128xf32, #tpu.memory_space<vmem>>, %arg6: memref<1x32xf32, #tpu.memory_space<vmem>>, %arg7: memref<1x32xf32, #tpu.memory_space<vmem>>, %arg8: memref<32x128xbf16, #tpu.memory_space<vmem>>, %arg9: memref<1x128xf32, #tpu.memory_space<vmem>>, %arg10: memref<128x32xbf16, #tpu.memory_space<vmem>>, %arg11: memref<1x32xf32, #tpu.memory_space<vmem>>, %arg12: memref<1x8x32xf32, #tpu.memory_space<vmem>>, %arg13: memref<8x32xbf16, #tpu.memory_space<vmem>>, %arg14: memref<8x32xf32, #tpu.memory_space<vmem>>) attributes {dimension_semantics = [#tpu.dimension_semantics<parallel>, #tpu.dimension_semantics<parallel>, #tpu.dimension_semantics<arbitrary>], iteration_bounds = array<i64: 2, 1, 1>, scalar_prefetch = 0 : i64, scratch_operands = 2 : i64, tpu.core_type = #tpu.core_type<tc>, window_params = [{transform_indices = @transform_0, window_bounds = array<i64: 1, 8, 32>}, {transform_indices = @transform_1, window_bounds = array<i64: 1, 1, 128>}, {transform_indices = @transform_2, window_bounds = array<i64: 1, 1, 128>}, {pipeline_mode = #tpu.pipeline_mode<synchronous>, transform_indices = @transform_3, window_bounds = array<i64: 1, 32>}, {pipeline_mode = #tpu.pipeline_mode<synchronous>, transform_indices = @transform_4, window_bounds = array<i64: 1, 32>}, {transform_indices = @transform_5, window_bounds = array<i64: 32, 128>}, {transform_indices = @transform_6, window_bounds = array<i64: 1, 128>}, {transform_indices = @transform_7, window_bounds = array<i64: 128, 32>}, {pipeline_mode = #tpu.pipeline_mode<synchronous>, transform_indices = @transform_8, window_bounds = array<i64: 1, 32>}, {transform_indices = @transform_9, window_bounds = array<i64: 1, 8, 32>}]} {
    %c0_i32 = arith.constant 0 : i32
    %0 = arith.cmpi eq, %arg2, %c0_i32 : i32
    %1 = arith.extui %0 : i1 to i32
    %c0_i32_0 = arith.constant 0 : i32
    %2 = arith.cmpi ne, %1, %c0_i32_0 : i32
    scf.if %2 {
      %c0_22 = arith.constant 0 : index
      %c0_23 = arith.constant 0 : index
      %c0_24 = arith.constant 0 : index
      %35 = vector.load %arg3[%c0_22, %c0_23, %c0_24] : memref<1x8x32xf32, #tpu.memory_space<vmem>>, vector<1x8x32xf32>
      %36 = vector.shape_cast %35 : vector<1x8x32xf32> to vector<8x32xf32>
      %cst_25 = arith.constant dense<0.000000e+00> : vector<8xf32>
      %37 = vector.multi_reduction <add>, %36, %cst_25 [1] : vector<8x32xf32> to vector<8xf32>
      %38 = vector.shape_cast %37 : vector<8xf32> to vector<8x1xf32>
      %cst_26 = arith.constant 3.200000e+01 : f32
      %39 = vector.broadcast %cst_26 : f32 to vector<8x1xf32>
      %40 = arith.divf %38, %39 : vector<8x1xf32>
      %41 = vector.broadcast %40 : vector<8x1xf32> to vector<8x32xf32>
      %42 = arith.subf %36, %41 : vector<8x32xf32>
      %43 = arith.mulf %42, %42 : vector<8x32xf32>
      %cst_27 = arith.constant dense<0.000000e+00> : vector<8xf32>
      %44 = vector.multi_reduction <add>, %43, %cst_27 [1] : vector<8x32xf32> to vector<8xf32>
      %45 = vector.shape_cast %44 : vector<8xf32> to vector<8x1xf32>
      %cst_28 = arith.constant 3.200000e+01 : f32
      %46 = vector.broadcast %cst_28 : f32 to vector<8x1xf32>
      %47 = arith.divf %45, %46 : vector<8x1xf32>
      %cst_29 = arith.constant 9.99999974E-6 : f32
      %48 = vector.broadcast %cst_29 : f32 to vector<8x1xf32>
      %49 = arith.addf %47, %48 : vector<8x1xf32>
      %50 = math.rsqrt %49 : vector<8x1xf32>
      %51 = vector.broadcast %50 : vector<8x1xf32> to vector<8x32xf32>
      %52 = arith.mulf %42, %51 : vector<8x32xf32>
      %c0_30 = arith.constant 0 : index
      %c0_31 = arith.constant 0 : index
      %53 = vector.load %arg6[%c0_30, %c0_31] : memref<1x32xf32, #tpu.memory_space<vmem>>, vector<1x32xf32>
      %54 = vector.broadcast %53 : vector<1x32xf32> to vector<8x32xf32>
      %55 = arith.mulf %52, %54 : vector<8x32xf32>
      %c0_32 = arith.constant 0 : index
      %c0_33 = arith.constant 0 : index
      %56 = vector.load %arg7[%c0_32, %c0_33] : memref<1x32xf32, #tpu.memory_space<vmem>>, vector<1x32xf32>
      %57 = vector.broadcast %56 : vector<1x32xf32> to vector<8x32xf32>
      %58 = arith.addf %55, %57 : vector<8x32xf32>
      %59 = arith.truncf %58 : vector<8x32xf32> to vector<8x32xbf16>
      %c0_34 = arith.constant 0 : index
      %c0_35 = arith.constant 0 : index
      %60 = vector.load %arg13[%c0_34, %c0_35] : memref<8x32xbf16, #tpu.memory_space<vmem>>, vector<8x32xbf16>
      tpu.vector_store %arg13[%c0_34, %c0_35], %59 {strides = array<i32>} : memref<8x32xbf16, #tpu.memory_space<vmem>>, vector<8x32xbf16>,
    } else {
    }
    %c0 = arith.constant 0 : index
    %c0_1 = arith.constant 0 : index
    %3 = vector.load %arg13[%c0, %c0_1] : memref<8x32xbf16, #tpu.memory_space<vmem>>, vector<8x32xbf16>
    %c0_2 = arith.constant 0 : index
    %c0_3 = arith.constant 0 : index
    %4 = vector.load %arg8[%c0_2, %c0_3] : memref<32x128xbf16, #tpu.memory_space<vmem>>, vector<32x128xbf16>
    %cst = arith.constant dense<0.000000e+00> : vector<8x128xf32>
    %5 = tpu.matmul %3, %4, %cst {dimension_numbers = #tpu.dot_dimension_numbers<[1], [0], [0], [1], [0, 0, 1, 1], [], []>} : vector<8x32xbf16>, vector<32x128xbf16>, vector<8x128xf32> -> vector<8x128xf32>
    %c0_4 = arith.constant 0 : index
    %c0_5 = arith.constant 0 : index
    %6 = vector.load %arg9[%c0_4, %c0_5] : memref<1x128xf32, #tpu.memory_space<vmem>>, vector<1x128xf32>
    %7 = vector.broadcast %6 : vector<1x128xf32> to vector<8x128xf32>
    %8 = arith.addf %5, %7 : vector<8x128xf32>
    %9 = arith.negf %8 : vector<8x128xf32>
    %10 = math.exp %9 : vector<8x128xf32>
    %cst_6 = arith.constant 1.000000e+00 : f32
    %11 = vector.broadcast %cst_6 : f32 to vector<8x128xf32>
    %12 = arith.addf %11, %10 : vector<8x128xf32>
    %13 = arith.divf %11, %12 : vector<8x128xf32>
    %14 = arith.mulf %8, %13 : vector<8x128xf32>
    %c0_7 = arith.constant 0 : index
    %c0_8 = arith.constant 0 : index
    %c0_9 = arith.constant 0 : index
    %15 = vector.load %arg4[%c0_7, %c0_8, %c0_9] : memref<1x1x128xf32, #tpu.memory_space<vmem>>, vector<1x1x128xf32>
    %16 = vector.shape_cast %15 : vector<1x1x128xf32> to vector<1x128xf32>
    %17 = vector.broadcast %16 : vector<1x128xf32> to vector<8x128xf32>
    %18 = arith.mulf %14, %17 : vector<8x128xf32>
    %c0_10 = arith.constant 0 : index
    %c0_11 = arith.constant 0 : index
    %c0_12 = arith.constant 0 : index
    %19 = vector.load %arg5[%c0_10, %c0_11, %c0_12] : memref<1x1x128xf32, #tpu.memory_space<vmem>>, vector<1x1x128xf32>
    %20 = vector.shape_cast %19 : vector<1x1x128xf32> to vector<1x128xf32>
    %21 = vector.broadcast %20 : vector<1x128xf32> to vector<8x128xf32>
    %22 = arith.addf %18, %21 : vector<8x128xf32>
    %23 = arith.truncf %22 : vector<8x128xf32> to vector<8x128xbf16>
    %c0_13 = arith.constant 0 : index
    %c0_14 = arith.constant 0 : index
    %24 = vector.load %arg10[%c0_13, %c0_14] : memref<128x32xbf16, #tpu.memory_space<vmem>>, vector<128x32xbf16>
    %cst_15 = arith.constant dense<0.000000e+00> : vector<8x32xf32>
    %25 = tpu.matmul %23, %24, %cst_15 {dimension_numbers = #tpu.dot_dimension_numbers<[1], [0], [0], [1], [0, 0, 1, 1], [], []>} : vector<8x128xbf16>, vector<128x32xbf16>, vector<8x32xf32> -> vector<8x32xf32>
    %c0_i32_16 = arith.constant 0 : i32
    %26 = arith.cmpi eq, %arg2, %c0_i32_16 : i32
    %27 = arith.extui %26 : i1 to i32
    %c0_i32_17 = arith.constant 0 : i32
    %28 = arith.cmpi ne, %27, %c0_i32_17 : i32
    scf.if %28 {
      %c0_22 = arith.constant 0 : index
      %c0_23 = arith.constant 0 : index
      %35 = vector.load %arg14[%c0_22, %c0_23] : memref<8x32xf32, #tpu.memory_space<vmem>>, vector<8x32xf32>
      tpu.vector_store %arg14[%c0_22, %c0_23], %25 {strides = array<i32>} : memref<8x32xf32, #tpu.memory_space<vmem>>, vector<8x32xf32>,
    } else {
    }
    %c0_i32_18 = arith.constant 0 : i32
    %29 = arith.cmpi sgt, %arg2, %c0_i32_18 : i32
    %30 = arith.extui %29 : i1 to i32
    %c0_i32_19 = arith.constant 0 : i32
    %31 = arith.cmpi ne, %30, %c0_i32_19 : i32
    scf.if %31 {
      %c0_22 = arith.constant 0 : index
      %c0_23 = arith.constant 0 : index
      %35 = vector.load %arg14[%c0_22, %c0_23] : memref<8x32xf32, #tpu.memory_space<vmem>>, vector<8x32xf32>
      %36 = arith.addf %35, %25 : vector<8x32xf32>
      %c0_24 = arith.constant 0 : index
      %c0_25 = arith.constant 0 : index
      %37 = vector.load %arg14[%c0_24, %c0_25] : memref<8x32xf32, #tpu.memory_space<vmem>>, vector<8x32xf32>
      tpu.vector_store %arg14[%c0_24, %c0_25], %36 {strides = array<i32>} : memref<8x32xf32, #tpu.memory_space<vmem>>, vector<8x32xf32>,
    } else {
    }
    %c0_i32_20 = arith.constant 0 : i32
    %32 = arith.cmpi eq, %arg2, %c0_i32_20 : i32
    %33 = arith.extui %32 : i1 to i32
    %c0_i32_21 = arith.constant 0 : i32
    %34 = arith.cmpi ne, %33, %c0_i32_21 : i32
    scf.if %34 {
      %c0_22 = arith.constant 0 : index
      %c0_23 = arith.constant 0 : index
      %35 = vector.load %arg14[%c0_22, %c0_23] : memref<8x32xf32, #tpu.memory_space<vmem>>, vector<8x32xf32>
      %c0_24 = arith.constant 0 : index
      %c0_25 = arith.constant 0 : index
      %36 = vector.load %arg11[%c0_24, %c0_25] : memref<1x32xf32, #tpu.memory_space<vmem>>, vector<1x32xf32>
      %37 = vector.broadcast %36 : vector<1x32xf32> to vector<8x32xf32>
      %38 = arith.addf %35, %37 : vector<8x32xf32>
      %c0_26 = arith.constant 0 : index
      %c0_27 = arith.constant 0 : index
      %c0_28 = arith.constant 0 : index
      %39 = vector.load %arg12[%c0_26, %c0_27, %c0_28] : memref<1x8x32xf32, #tpu.memory_space<vmem>>, vector<1x8x32xf32>
      %40 = vector.shape_cast %39 : vector<1x8x32xf32> to vector<8x32xf32>
      %41 = vector.shape_cast %38 : vector<8x32xf32> to vector<1x8x32xf32>
      tpu.vector_store %arg12[%c0_26, %c0_27, %c0_28], %41 {strides = array<i32>} : memref<1x8x32xf32, #tpu.memory_space<vmem>>, vector<1x8x32xf32>,
    } else {
    }
    return
  }
  func.func @transform_0(%arg0: i32, %arg1: i32, %arg2: i32) -> (i32, i32, i32) {
    %c0_i32 = arith.constant 0 : i32
    %c0_i32_0 = arith.constant 0 : i32
    return %arg0, %arg1, %c0_i32 : i32, i32, i32
  }
  func.func @transform_1(%arg0: i32, %arg1: i32, %arg2: i32) -> (i32, i32, i32) {
    %c0_i32 = arith.constant 0 : i32
    %c0_i32_0 = arith.constant 0 : i32
    return %arg0, %c0_i32, %arg2 : i32, i32, i32
  }
  func.func @transform_2(%arg0: i32, %arg1: i32, %arg2: i32) -> (i32, i32, i32) {
    %c0_i32 = arith.constant 0 : i32
    %c0_i32_0 = arith.constant 0 : i32
    return %arg0, %c0_i32, %arg2 : i32, i32, i32
  }
  func.func @transform_3(%arg0: i32, %arg1: i32, %arg2: i32) -> (i32, i32) {
    %c0_i32 = arith.constant 0 : i32
    %c0_i32_0 = arith.constant 0 : i32
    %c0_i32_1 = arith.constant 0 : i32
    return %c0_i32, %c0_i32_0 : i32, i32
  }
  func.func @transform_4(%arg0: i32, %arg1: i32, %arg2: i32) -> (i32, i32) {
    %c0_i32 = arith.constant 0 : i32
    %c0_i32_0 = arith.constant 0 : i32
    %c0_i32_1 = arith.constant 0 : i32
    return %c0_i32, %c0_i32_0 : i32, i32
  }
  func.func @transform_5(%arg0: i32, %arg1: i32, %arg2: i32) -> (i32, i32) {
    %c0_i32 = arith.constant 0 : i32
    %c0_i32_0 = arith.constant 0 : i32
    return %c0_i32, %arg2 : i32, i32
  }
  func.func @transform_6(%arg0: i32, %arg1: i32, %arg2: i32) -> (i32, i32) {
    %c0_i32 = arith.constant 0 : i32
    %c0_i32_0 = arith.constant 0 : i32
    return %c0_i32, %arg2 : i32, i32
  }
  func.func @transform_7(%arg0: i32, %arg1: i32, %arg2: i32) -> (i32, i32) {
    %c0_i32 = arith.constant 0 : i32
    %c0_i32_0 = arith.constant 0 : i32
    return %arg2, %c0_i32 : i32, i32
  }
  func.func @transform_8(%arg0: i32, %arg1: i32, %arg2: i32) -> (i32, i32) {
    %c0_i32 = arith.constant 0 : i32
    %c0_i32_0 = arith.constant 0 : i32
    %c0_i32_1 = arith.constant 0 : i32
    return %c0_i32, %c0_i32_0 : i32, i32
  }
  func.func @transform_9(%arg0: i32, %arg1: i32, %arg2: i32) -> (i32, i32, i32) {
    %c0_i32 = arith.constant 0 : i32
    %c0_i32_0 = arith.constant 0 : i32
    return %arg0, %arg1, %c0_i32 : i32, i32, i32
  }
}

</mosaic_0001>

<llo_original>
// kernel: tpu_custom_call.1
$region0: #{tpu_custom_call.1}
  #allocation0 [shape = 'u32[]', space=smem, size = 0x4, offset = 0x4, fixed_abs, tag = 'smem constant byte address 0x4 - core index']
  #allocation1 [shape = 'u32[72,128]{1,0:T(1,128)}', space=vmem, size = 0x9000, scoped, tag = 'internal scratch']
  #allocation2 [shape = 'bf16[8,32]{1,0:T(8,128)(2,1)}', space=vmem, size = 0x800, scoped, tag = 'scratch operand']
  #allocation3 [shape = 'f32[8,32]{1,0:T(8,128)}', space=vmem, size = 0x1000, scoped, tag = 'scratch operand']
  %s0 = inlined_call_operand.vmem [shape: f32[2,8,32], index: 0, kind: input, shape index: {}]
  %s1 = inlined_call_operand.vmem [shape: f32[2,1,128], index: 1, kind: input, shape index: {}]
  %s2 = inlined_call_operand.vmem [shape: f32[2,1,128], index: 2, kind: input, shape index: {}]
  %s3 = inlined_call_operand.vmem [shape: f32[1,32], index: 3, kind: input, shape index: {}]
  %s4 = inlined_call_operand.vmem [shape: f32[1,32], index: 4, kind: input, shape index: {}]
  %s5 = inlined_call_operand.vmem [shape: bf16[32,128], index: 5, kind: input, shape index: {}]
  %s6 = inlined_call_operand.vmem [shape: f32[1,128], index: 6, kind: input, shape index: {}]
  %s7 = inlined_call_operand.vmem [shape: bf16[128,32], index: 7, kind: input, shape index: {}]
  %s8 = inlined_call_operand.vmem [shape: f32[1,32], index: 8, kind: input, shape index: {}]
  %s9 = inlined_call_operand.hbm [shape: f32[2,8,32], index: 9, kind: output, shape index: {}]
  %s10 = sld [smem:[#allocation0]]
  $region85: #{tpu_custom_call.1} parent=0
    _
  %s12 = ssub.s32 1, %s10
  %s13 = scalar_select 0, %s12, %s10
  $region1: #{tpu_custom_call.1} parent=0
    #allocation4 [shape = 'u8[8192]{0}', space=vmem, size = 0x2000, scoped, tag = 'output window, operand 0']
    #allocation5 [shape = 's32[2]{0}', space=sflag, size = 0x8, scoped, tag = 'scoped memory for tpu_custom_call.1']
    %14 = vsyncpa [#allocation5], 0
    %s15 = scalar_lea.sflag [#allocation5], 1
    %16 = vsyncpa %s15, 0
    loop: start=0, step=1, limit=4
    $region2: #{tpu_custom_call.1} parent=1 // loop_pre_header
      _
    $region3: #{tpu_custom_call.1} parent=1 // loop_header
      %s18 = sphi 0, %s22
      %p19 = scmp.ge.s32.totalorder %s18, 4
      %s25 = sphi 0, %s44
      %s26 = sphi 0, %s40
      %s27 = sphi 0, %s36
      %s28 = sphi 0, %s25
      %s29 = sphi 0, %s26
      %s30 = sphi 0, %s27
      %s31 = sphi 0, %s28
      %s32 = sphi 0, %s29
      %s33 = sphi 0, %s30
      %s49 = sphi 0, %s51
      %s52 = sphi 0, %s49
      %s53 = sphi 0, %s52
      %s69 = sphi 0, %s53
      %s77 = sphi 0, %s79
      %s80 = sphi 0, %s77
      %s81 = sphi 0, %s80
      %s97 = sphi 0, %s81
      %s105 = sphi 0, %s107
      %s108 = sphi 0, %s105
      %s109 = sphi 0, %s108
      %s125 = sphi 0, %s109
      %s129 = sphi 0, %s129
      %s131 = sphi 0, %s129
      %s132 = sphi 0, %s131
      %s146 = sphi 0, %s132
      %s150 = sphi 0, %s150
      %s152 = sphi 0, %s150
      %s153 = sphi 0, %s152
      %s167 = sphi 0, %s153
      %s173 = sphi 0, %s175
      %s176 = sphi 0, %s173
      %s177 = sphi 0, %s176
      %s193 = sphi 0, %s177
      %s199 = sphi 0, %s201
      %s202 = sphi 0, %s199
      %s203 = sphi 0, %s202
      %s219 = sphi 0, %s203
      %s225 = sphi 0, %s227
      %s228 = sphi 0, %s225
      %s229 = sphi 0, %s228
      %s245 = sphi 0, %s229
      %s249 = sphi 0, %s249
      %s251 = sphi 0, %s249
      %s252 = sphi 0, %s251
      %s266 = sphi 0, %s252
      %s274 = sphi 0, %s276
      %s277 = sphi 0, %s274
      %s278 = sphi 0, %s277
      %s294 = sphi 0, %s278
    $region4: #{tpu_custom_call.1} parent=1 // loop_header_branch
      %21 = sbr.rel (%p19) target = $region8
    $region5: #{tpu_custom_call.1} parent=1 // loop_body
      %s23 = ssub.s32 %s18, 1
      %s24 = ssub.s32 %s18, 2
      %s34 = sadd.s32 1, %s27
      %p35 = scmp.ge.s32.totalorder %s34, 1
      %s36 = scalar_select %p35, 0, %s34
      %s37 = sadd.s32 1, %s26
      %s38 = scalar_select %p35, %s37, %s26
      %p39 = scmp.ge.s32.totalorder %s38, 1
      %s40 = scalar_select %p39, 0, %s38
      %s41 = sadd.s32 1, %s25
      %s42 = scalar_select %p39, %s41, %s25
      %p43 = scmp.ge.s32.totalorder %s42, 2
      %s44 = scalar_select %p43, 0, %s42
      %s45 = ssub.s32 %s25, %s44
      %s46 = ssub.s32 %s26, %s40
      %s47 = sor.u32 %s45, %s46
      %p48 = scmp.eq.s32.totalorder %s47, 0
      %s50 = sadd.s32 %s49, 1
      %s51 = scalar_select %p48, %s49, %s50
      %p54 = pneg %p48
      %p55 = scmp.eq.s32.totalorder %s18, 1
      %p56 = por %p54, %p55
      %p57 = scmp.ne.s32.totalorder %s49, %s52
      %p58 = scmp.eq.s32.totalorder %s18, 0
      %p59 = por %p57, %p58
      %p60 = scmp.ne.s32.totalorder %s49, %s52
      %p61 = scmp.eq.s32.totalorder %s23, 1
      %p62 = por %p60, %p61
      %p63 = scmp.ne.s32.totalorder %s52, %s53
      %p64 = scmp.eq.s32.totalorder %s23, 0
      %p65 = por %p63, %p64
      %p66 = scmp.ne.s32.totalorder %s52, %s53
      %p67 = scmp.eq.s32.totalorder %s24, 1
      %p68 = por %p66, %p67
      %p70 = scmp.ne.s32.totalorder %s53, %s69
      %p71 = scmp.eq.s32.totalorder %s24, 0
      %p72 = por %p70, %p71
      %s73 = ssub.s32 %s25, %s44
      %s74 = ssub.s32 %s27, %s36
      %s75 = sor.u32 %s73, %s74
      %p76 = scmp.eq.s32.totalorder %s75, 0
      %s78 = sadd.s32 %s77, 1
      %s79 = scalar_select %p76, %s77, %s78
      %p82 = pneg %p76
      %p83 = scmp.eq.s32.totalorder %s18, 1
      %p84 = por %p82, %p83
      %p85 = scmp.ne.s32.totalorder %s77, %s80
      %p86 = scmp.eq.s32.totalorder %s18, 0
      %p87 = por %p85, %p86
      %p88 = scmp.ne.s32.totalorder %s77, %s80
      %p89 = scmp.eq.s32.totalorder %s23, 1
      %p90 = por %p88, %p89
      %p91 = scmp.ne.s32.totalorder %s80, %s81
      %p92 = scmp.eq.s32.totalorder %s23, 0
      %p93 = por %p91, %p92
      %p94 = scmp.ne.s32.totalorder %s80, %s81
      %p95 = scmp.eq.s32.totalorder %s24, 1
      %p96 = por %p94, %p95
      %p98 = scmp.ne.s32.totalorder %s81, %s97
      %p99 = scmp.eq.s32.totalorder %s24, 0
      %p100 = por %p98, %p99
      %s101 = ssub.s32 %s25, %s44
      %s102 = ssub.s32 %s27, %s36
      %s103 = sor.u32 %s101, %s102
      %p104 = scmp.eq.s32.totalorder %s103, 0
      %s106 = sadd.s32 %s105, 1
      %s107 = scalar_select %p104, %s105, %s106
      %p110 = pneg %p104
      %p111 = scmp.eq.s32.totalorder %s18, 1
      %p112 = por %p110, %p111
      %p113 = scmp.ne.s32.totalorder %s105, %s108
      %p114 = scmp.eq.s32.totalorder %s18, 0
      %p115 = por %p113, %p114
      %p116 = scmp.ne.s32.totalorder %s105, %s108
      %p117 = scmp.eq.s32.totalorder %s23, 1
      %p118 = por %p116, %p117
      %p119 = scmp.ne.s32.totalorder %s108, %s109
      %p120 = scmp.eq.s32.totalorder %s23, 0
      %p121 = por %p119, %p120
      %p122 = scmp.ne.s32.totalorder %s108, %s109
      %p123 = scmp.eq.s32.totalorder %s24, 1
      %p124 = por %p122, %p123
      %p126 = scmp.ne.s32.totalorder %s109, %s125
      %p127 = scmp.eq.s32.totalorder %s24, 0
      %p128 = por %p126, %p127
      %s130 = sadd.s32 %s129, 1
      %p133 = scmp.eq.s32.totalorder %s18, 1
      %p134 = scmp.ne.s32.totalorder %s129, %s131
      %p135 = scmp.eq.s32.totalorder %s18, 0
      %p136 = por %p134, %p135
      %p137 = scmp.ne.s32.totalorder %s129, %s131
      %p138 = scmp.eq.s32.totalorder %s23, 1
      %p139 = por %p137, %p138
      %p140 = scmp.ne.s32.totalorder %s131, %s132
      %p141 = scmp.eq.s32.totalorder %s23, 0
      %p142 = por %p140, %p141
      %p143 = scmp.ne.s32.totalorder %s131, %s132
      %p144 = scmp.eq.s32.totalorder %s24, 1
      %p145 = por %p143, %p144
      %p147 = scmp.ne.s32.totalorder %s132, %s146
      %p148 = scmp.eq.s32.totalorder %s24, 0
      %p149 = por %p147, %p148
      %s151 = sadd.s32 %s150, 1
      %p154 = scmp.eq.s32.totalorder %s18, 1
      %p155 = scmp.ne.s32.totalorder %s150, %s152
      %p156 = scmp.eq.s32.totalorder %s18, 0
      %p157 = por %p155, %p156
      %p158 = scmp.ne.s32.totalorder %s150, %s152
      %p159 = scmp.eq.s32.totalorder %s23, 1
      %p160 = por %p158, %p159
      %p161 = scmp.ne.s32.totalorder %s152, %s153
      %p162 = scmp.eq.s32.totalorder %s23, 0
      %p163 = por %p161, %p162
      %p164 = scmp.ne.s32.totalorder %s152, %s153
      %p165 = scmp.eq.s32.totalorder %s24, 1
      %p166 = por %p164, %p165
      %p168 = scmp.ne.s32.totalorder %s153, %s167
      %p169 = scmp.eq.s32.totalorder %s24, 0
      %p170 = por %p168, %p169
      %s171 = ssub.s32 %s27, %s36
      %p172 = scmp.eq.s32.totalorder %s171, 0
      %s174 = sadd.s32 %s173, 1
      %s175 = scalar_select %p172, %s173, %s174
      %p178 = pneg %p172
      %p179 = scmp.eq.s32.totalorder %s18, 1
      %p180 = por %p178, %p179
      %p181 = scmp.ne.s32.totalorder %s173, %s176
      %p182 = scmp.eq.s32.totalorder %s18, 0
      %p183 = por %p181, %p182
      %p184 = scmp.ne.s32.totalorder %s173, %s176
      %p185 = scmp.eq.s32.totalorder %s23, 1
      %p186 = por %p184, %p185
      %p187 = scmp.ne.s32.totalorder %s176, %s177
      %p188 = scmp.eq.s32.totalorder %s23, 0
      %p189 = por %p187, %p188
      %p190 = scmp.ne.s32.totalorder %s176, %s177
      %p191 = scmp.eq.s32.totalorder %s24, 1
      %p192 = por %p190, %p191
      %p194 = scmp.ne.s32.totalorder %s177, %s193
      %p195 = scmp.eq.s32.totalorder %s24, 0
      %p196 = por %p194, %p195
      %s197 = ssub.s32 %s27, %s36
      %p198 = scmp.eq.s32.totalorder %s197, 0
      %s200 = sadd.s32 %s199, 1
      %s201 = scalar_select %p198, %s199, %s200
      %p204 = pneg %p198
      %p205 = scmp.eq.s32.totalorder %s18, 1
      %p206 = por %p204, %p205
      %p207 = scmp.ne.s32.totalorder %s199, %s202
      %p208 = scmp.eq.s32.totalorder %s18, 0
      %p209 = por %p207, %p208
      %p210 = scmp.ne.s32.totalorder %s199, %s202
      %p211 = scmp.eq.s32.totalorder %s23, 1
      %p212 = por %p210, %p211
      %p213 = scmp.ne.s32.totalorder %s202, %s203
      %p214 = scmp.eq.s32.totalorder %s23, 0
      %p215 = por %p213, %p214
      %p216 = scmp.ne.s32.totalorder %s202, %s203
      %p217 = scmp.eq.s32.totalorder %s24, 1
      %p218 = por %p216, %p217
      %p220 = scmp.ne.s32.totalorder %s203, %s219
      %p221 = scmp.eq.s32.totalorder %s24, 0
      %p222 = por %p220, %p221
      %s223 = ssub.s32 %s27, %s36
      %p224 = scmp.eq.s32.totalorder %s223, 0
      %s226 = sadd.s32 %s225, 1
      %s227 = scalar_select %p224, %s225, %s226
      %p230 = pneg %p224
      %p231 = scmp.eq.s32.totalorder %s18, 1
      %p232 = por %p230, %p231
      %p233 = scmp.ne.s32.totalorder %s225, %s228
      %p234 = scmp.eq.s32.totalorder %s18, 0
      %p235 = por %p233, %p234
      %p236 = scmp.ne.s32.totalorder %s225, %s228
      %p237 = scmp.eq.s32.totalorder %s23, 1
      %p238 = por %p236, %p237
      %p239 = scmp.ne.s32.totalorder %s228, %s229
      %p240 = scmp.eq.s32.totalorder %s23, 0
      %p241 = por %p239, %p240
      %p242 = scmp.ne.s32.totalorder %s228, %s229
      %p243 = scmp.eq.s32.totalorder %s24, 1
      %p244 = por %p242, %p243
      %p246 = scmp.ne.s32.totalorder %s229, %s245
      %p247 = scmp.eq.s32.totalorder %s24, 0
      %p248 = por %p246, %p247
      %s250 = sadd.s32 %s249, 1
      %p253 = scmp.eq.s32.totalorder %s18, 1
      %p254 = scmp.ne.s32.totalorder %s249, %s251
      %p255 = scmp.eq.s32.totalorder %s18, 0
      %p256 = por %p254, %p255
      %p257 = scmp.ne.s32.totalorder %s249, %s251
      %p258 = scmp.eq.s32.totalorder %s23, 1
      %p259 = por %p257, %p258
      %p260 = scmp.ne.s32.totalorder %s251, %s252
      %p261 = scmp.eq.s32.totalorder %s23, 0
      %p262 = por %p260, %p261
      %p263 = scmp.ne.s32.totalorder %s251, %s252
      %p264 = scmp.eq.s32.totalorder %s24, 1
      %p265 = por %p263, %p264
      %p267 = scmp.ne.s32.totalorder %s252, %s266
      %p268 = scmp.eq.s32.totalorder %s24, 0
      %p269 = por %p267, %p268
      %s270 = ssub.s32 %s25, %s44
      %s271 = ssub.s32 %s26, %s40
      %s272 = sor.u32 %s270, %s271
      %p273 = scmp.eq.s32.totalorder %s272, 0
      %s275 = sadd.s32 %s274, 1
      %s276 = scalar_select %p273, %s274, %s275
      %p279 = pneg %p273
      %p280 = scmp.eq.s32.totalorder %s18, 1
      %p281 = por %p279, %p280
      %p282 = scmp.ne.s32.totalorder %s274, %s277
      %p283 = scmp.eq.s32.totalorder %s18, 0
      %p284 = por %p282, %p283
      %p285 = scmp.ne.s32.totalorder %s274, %s277
      %p286 = scmp.eq.s32.totalorder %s23, 1
      %p287 = por %p285, %p286
      %p288 = scmp.ne.s32.totalorder %s277, %s278
      %p289 = scmp.eq.s32.totalorder %s23, 0
      %p290 = por %p288, %p289
      %p291 = scmp.ne.s32.totalorder %s277, %s278
      %p292 = scmp.eq.s32.totalorder %s24, 1
      %p293 = por %p291, %p292
      %p295 = scmp.ne.s32.totalorder %s278, %s294
      %p296 = scmp.eq.s32.totalorder %s24, 0
      %p297 = por %p295, %p296
      %p298 = scmp.le.s32.totalorder 1, %s18
      %p299 = scmp.lt.s32.totalorder %s18, 3
      %p300 = pnand %p298, %p299
      %p301 = pneg %p300
      // Predicated region
      $region9: #{tpu_custom_call.1} parent=5 // pred_check
        _
      $region10: #{tpu_custom_call.1} parent=5 // pred_check_branch
        %303 = sbr.rel (%p300) target = $region12
      $region11: #{tpu_custom_call.1} parent=5 // pred_region
        %s304 = ssub.s32 %s18, 1
        // Predicated region
        $region13: #{tpu_custom_call.1} parent=11 // pred_check
          %p305 = pneg %p142
        $region14: #{tpu_custom_call.1} parent=11 // pred_check_branch
          %307 = sbr.rel (%p305) target = $region16
        $region15: #{tpu_custom_call.1} parent=11 // pred_region
          _
        $region16: #{tpu_custom_call.1} parent=11 // pred_fallthru
          _
        // Predicated region
        $region17: #{tpu_custom_call.1} parent=11 // pred_check
          %p308 = pneg %p163
        $region18: #{tpu_custom_call.1} parent=11 // pred_check_branch
          %310 = sbr.rel (%p308) target = $region20
        $region19: #{tpu_custom_call.1} parent=11 // pred_region
          _
        $region20: #{tpu_custom_call.1} parent=11 // pred_fallthru
          _
        // Predicated region
        $region21: #{tpu_custom_call.1} parent=11 // pred_check
          %p311 = pneg %p189
        $region22: #{tpu_custom_call.1} parent=11 // pred_check_branch
          %313 = sbr.rel (%p311) target = $region24
        $region23: #{tpu_custom_call.1} parent=11 // pred_region
          %p314 = scmp.lt.s32.totalorder %s30, 0
          %s315 = scalar_select %p314, %s30, 0
          %s316 = smul.addr %s315, 4
          %s317 = scalar_lea.vmem %s5, %s316
        $region24: #{tpu_custom_call.1} parent=11 // pred_fallthru
          _
        // Predicated region
        $region25: #{tpu_custom_call.1} parent=11 // pred_check
          %p318 = pneg %p215
        $region26: #{tpu_custom_call.1} parent=11 // pred_check_branch
          %320 = sbr.rel (%p318) target = $region28
        $region27: #{tpu_custom_call.1} parent=11 // pred_region
          %p321 = scmp.lt.s32.totalorder %s30, 0
          %s322 = scalar_select %p321, %s30, 0
          %s323 = scalar_lea.vmem %s6, %s322
        $region28: #{tpu_custom_call.1} parent=11 // pred_fallthru
          _
        // Predicated region
        $region29: #{tpu_custom_call.1} parent=11 // pred_check
          %p324 = pneg %p241
        $region30: #{tpu_custom_call.1} parent=11 // pred_check_branch
          %326 = sbr.rel (%p324) target = $region32
        $region31: #{tpu_custom_call.1} parent=11 // pred_region
          %s327 = smul.u32 16, %s30
          %p328 = scmp.lt.s32.totalorder %s327, 15
          %s329 = scalar_select %p328, %s327, 15
          %s330 = smul.addr %s329, 4
          %s331 = scalar_lea.vmem %s7, %s330
          %s332 = smul.u32 16, %s30
        $region32: #{tpu_custom_call.1} parent=11 // pred_fallthru
          _
        // Predicated region
        $region33: #{tpu_custom_call.1} parent=11 // pred_check
          %p333 = pneg %p262
        $region34: #{tpu_custom_call.1} parent=11 // pred_check_branch
          %335 = sbr.rel (%p333) target = $region36
        $region35: #{tpu_custom_call.1} parent=11 // pred_region
          _
        $region36: #{tpu_custom_call.1} parent=11 // pred_fallthru
          _
      $region12: #{tpu_custom_call.1} parent=5 // pred_fallthru
        _
      %p336 = scmp.lt.s32.totalorder %s18, 2
      // Predicated region
      $region37: #{tpu_custom_call.1} parent=5 // pred_check
        %p337 = pneg %p336
      $region38: #{tpu_custom_call.1} parent=5 // pred_check_branch
        %339 = sbr.rel (%p337) target = $region40
      $region39: #{tpu_custom_call.1} parent=5 // pred_region
        // Predicated region
        $region41: #{tpu_custom_call.1} parent=39 // pred_check
          %p340 = pneg %p59
        $region42: #{tpu_custom_call.1} parent=39 // pred_check_branch
          %342 = sbr.rel (%p340) target = $region44
        $region43: #{tpu_custom_call.1} parent=39 // pred_region
          %p343 = scmp.lt.s32.totalorder %s25, 1
          %s344 = scalar_select %p343, %s25, 1
          %p345 = scmp.lt.s32.totalorder %s26, 0
          %s346 = scalar_select %p345, %s26, 0
          %s347 = sadd.s32 %s346, %s344
          %s348 = smul.addr %s347, 8
          %s349 = scalar_lea.vmem %s0, %s348
        $region44: #{tpu_custom_call.1} parent=39 // pred_fallthru
          _
        // Predicated region
        $region45: #{tpu_custom_call.1} parent=39 // pred_check
          %p350 = pneg %p87
        $region46: #{tpu_custom_call.1} parent=39 // pred_check_branch
          %352 = sbr.rel (%p350) target = $region48
        $region47: #{tpu_custom_call.1} parent=39 // pred_region
          %p353 = scmp.lt.s32.totalorder %s25, 1
          %s354 = scalar_select %p353, %s25, 1
          %p355 = scmp.lt.s32.totalorder %s27, 0
          %s356 = scalar_select %p355, %s27, 0
          %s357 = sadd.s32 %s356, %s354
          %s358 = scalar_lea.vmem %s1, %s357
        $region48: #{tpu_custom_call.1} parent=39 // pred_fallthru
          _
        // Predicated region
        $region49: #{tpu_custom_call.1} parent=39 // pred_check
          %p359 = pneg %p115
        $region50: #{tpu_custom_call.1} parent=39 // pred_check_branch
          %361 = sbr.rel (%p359) target = $region52
        $region51: #{tpu_custom_call.1} parent=39 // pred_region
          %p362 = scmp.lt.s32.totalorder %s25, 1
          %s363 = scalar_select %p362, %s25, 1
          %p364 = scmp.lt.s32.totalorder %s27, 0
          %s365 = scalar_select %p364, %s27, 0
          %s366 = sadd.s32 %s365, %s363
          %s367 = scalar_lea.vmem %s2, %s366
        $region52: #{tpu_custom_call.1} parent=39 // pred_fallthru
          _
      $region40: #{tpu_custom_call.1} parent=5 // pred_fallthru
        _
      %p368 = scmp.le.s32.totalorder 1, %s18
      %p369 = scmp.lt.s32.totalorder %s18, 3
      %p370 = pnand %p368, %p369
      %p371 = pneg %p370
      // Predicated region
      $region53: #{tpu_custom_call.1} parent=5 // pred_check
        _
      $region54: #{tpu_custom_call.1} parent=5 // pred_check_branch
        %373 = sbr.rel (%p370) target = $region56
      $region55: #{tpu_custom_call.1} parent=5 // pred_region
        %s374 = ssub.s32 %s18, 1
        %p375 = scmp.lt.s32.totalorder %s28, 1
        %s376 = scalar_select %p375, %s28, 1
        %p377 = scmp.lt.s32.totalorder %s29, 0
        %s378 = scalar_select %p377, %s29, 0
        %s379 = sadd.s32 %s378, %s376
        %s380 = smul.addr %s379, 8
        %s381 = scalar_lea.vmem %s0, %s380
        %p382 = pneg %p65
        %p383 = pneg %p62
        %p384 = scmp.lt.s32.totalorder %s28, 1
        %s385 = scalar_select %p384, %s28, 1
        %p386 = scmp.lt.s32.totalorder %s30, 0
        %s387 = scalar_select %p386, %s30, 0
        %s388 = sadd.s32 %s387, %s385
        %s389 = scalar_lea.vmem %s1, %s388
        %p390 = pneg %p93
        %p391 = pneg %p90
        %p392 = scmp.lt.s32.totalorder %s28, 1
        %s393 = scalar_select %p392, %s28, 1
        %p394 = scmp.lt.s32.totalorder %s30, 0
        %s395 = scalar_select %p394, %s30, 0
        %s396 = sadd.s32 %s395, %s393
        %s397 = scalar_lea.vmem %s2, %s396
        %p398 = pneg %p121
        %p399 = pneg %p118
        %p400 = pneg %p142
        %p401 = pneg %p139
        %p402 = pneg %p163
        %p403 = pneg %p160
        %p404 = scmp.lt.s32.totalorder %s30, 0
        %s405 = scalar_select %p404, %s30, 0
        %s406 = smul.addr %s405, 4
        %s407 = scalar_lea.vmem %s5, %s406
        %p408 = pneg %p189
        %p409 = pneg %p186
        %p410 = scmp.lt.s32.totalorder %s30, 0
        %s411 = scalar_select %p410, %s30, 0
        %s412 = scalar_lea.vmem %s6, %s411
        %p413 = pneg %p215
        %p414 = pneg %p212
        %s415 = smul.u32 16, %s30
        %p416 = scmp.lt.s32.totalorder %s415, 15
        %s417 = scalar_select %p416, %s415, 15
        %s418 = smul.addr %s417, 4
        %s419 = scalar_lea.vmem %s7, %s418
        %p420 = pneg %p241
        %p421 = pneg %p238
        %p422 = pneg %p262
        %p423 = pneg %p259
        %p424 = pneg %p290
        %p425 = pneg %p287
        %s426 = sand.u32 %s277, 1
        %s427 = scalar_lea.sflag [#allocation5], %s426
        %s428 = sand.u32 %s277, 1
        %s429 = smul.addr %s428, 8
        %s430 = scalar_lea.vmem [#allocation4], %s429
        %p431 = scmp.lt.s32.totalorder %s28, 1
        %s432 = scalar_select %p431, %s28, 1
        %p433 = scmp.lt.s32.totalorder %s29, 0
        %s434 = scalar_select %p433, %s29, 0
        %s435 = sadd.s32 %s434, %s432
        %s436 = smul.addr %s435, 8
        %s437 = scalar_lea.vmem %s0, %s436
        %p438 = scmp.lt.s32.totalorder %s28, 1
        %s439 = scalar_select %p438, %s28, 1
        %p440 = scmp.lt.s32.totalorder %s30, 0
        %s441 = scalar_select %p440, %s30, 0
        %s442 = sadd.s32 %s441, %s439
        %s443 = scalar_lea.vmem %s1, %s442
        %p444 = scmp.lt.s32.totalorder %s28, 1
        %s445 = scalar_select %p444, %s28, 1
        %p446 = scmp.lt.s32.totalorder %s30, 0
        %s447 = scalar_select %p446, %s30, 0
        %s448 = sadd.s32 %s447, %s445
        %s449 = scalar_lea.vmem %s2, %s448
        %p450 = scmp.lt.s32.totalorder %s30, 0
        %s451 = scalar_select %p450, %s30, 0
        %s452 = smul.addr %s451, 4
        %s453 = scalar_lea.vmem %s5, %s452
        %p454 = scmp.lt.s32.totalorder %s30, 0
        %s455 = scalar_select %p454, %s30, 0
        %s456 = scalar_lea.vmem %s6, %s455
        %s457 = smul.u32 16, %s30
        %p458 = scmp.lt.s32.totalorder %s457, 15
        %s459 = scalar_select %p458, %s457, 15
        %s460 = smul.addr %s459, 4
        %s461 = scalar_lea.vmem %s7, %s460
        %s462 = smul.u32 16, %s30
        %p464 = scmp.eq.s32.totalorder %s30, 0
        // Predicated region
        $region57: #{tpu_custom_call.1} parent=55 // pred_check
          %p465 = pneg %p464
        $region58: #{tpu_custom_call.1} parent=55 // pred_check_branch
          %467 = sbr.rel (%p465) target = $region60
        $region59: #{tpu_custom_call.1} parent=55 // pred_region
          %v468 = vld [vmem:[%s437] sm:$0xff]
          %vm469 = vcmask 261120
          %v470 = vsel %vm469, %v468, 0.0
          %471 = vadd.xlane.f32.xlu0 %v470
          %v472 = vpop.xlane.xlu0 %471
          %v473 = vrcp.pop 32.0
          %v474 = vmul.f32 32.0, %v473
          %v475 = vsub.f32 1.0, %v474
          %v476 = vmul.f32 %v473, %v475
          %v477 = vadd.f32 %v473, %v476
          %vm478 = vweird.f32 %v473
          %v479 = vsel %vm478, %v473, %v477
          %v480 = vmul.f32 %v472, %v479
          %v481 = vsub.f32 %v468, %v480
          %v482 = vmul.f32 %v481, %v481
          %v483 = vsel %vm469, %v482, 0.0
          %484 = vadd.xlane.f32.xlu0 %v483
          %v485 = vpop.xlane.xlu0 %484
          %v486 = vmul.f32 %v485, %v479
          %v487 = vadd.f32 %v486, 1e-05
          %v488 = vrsqrt.pop %v487
          %v489 = vmul.f32 %v488, %v487
          %v490 = vmul.f32 %v489, %v488
          %v491 = vmul.f32 0.5, %v490
          %v492 = vsub.f32 1.5, %v491
          %v493 = vmul.f32 %v488, %v492
          %vm494 = vweird.f32 %v487
          %vm495 = vweird.f32 %v488
          %vm496 = vmor %vm494, %vm495
          %v497 = vsel %vm496, %v488, %v493
          %v498 = vmul.f32 %v481, %v497
          %v499 = vld [vmem:[%s3] sm:$0x1]
          %v501 = vperm.slane %v499, 0
          %v503 = vmul.f32 %v498, %v501
          %v504 = vld [vmem:[%s4] sm:$0x1]
          %v506 = vperm.slane %v504, 0
          %v508 = vadd.f32 %v503, %v506
          %v509 = vpack.c.bf16 %v508, %v508
          %vm510 = vcmask 257024
          %511 = vst.msk [vmem:[#allocation2] sm:$0xf] %vm510, %v509
        $region60: #{tpu_custom_call.1} parent=55 // pred_fallthru
          _
        %v512 = vld [vmem:[#allocation2] sm:$0xf]
        %v513 = vld [vmem:[%s453] sm:$0xf]
        %v514 = vld [vmem:[%s453 + $0x4] sm:$0xf]
        %v515 = vld [vmem:[%s453 + $0x8] sm:$0xf]
        %v516 = vld [vmem:[%s453 + $0xc] sm:$0xf]
        %v517 = vld [vmem:[%s456] sm:$0x1]
        %v519 = vperm.slane %v517, 0
        %v525 = vunpack.c.l.b16 %v513
        %v526 = vunpack.c.l.b16 %v514
        %v527 = vunpack.c.l.b16 %v515
        %v528 = vunpack.c.l.b16 %v516
        %v529 = vpack.c.b16 %v526, %v525
        %v530 = vpack.c.b16 %v528, %v527
        %vm533 = vcmask 261120
        %v535 = vsel %vm533, %v512, 0
        %537 = vmatpush.bf16.msra.mxu0 0
        %538 = vmatpush.bf16.msra.mxu0 0
        %539 = vmatpush.bf16.msra.mxu0 0
        %540 = vmatpush.bf16.msra.mxu0 0
        %541 = vmatpush.bf16.msra.mxu0 0
        %542 = vmatpush.bf16.msra.mxu0 0
        %543 = vmatpush.bf16.msra.mxu0 %v530
        %544 = vmatpush.bf16.msra.mxu0 %v529
        %545 = vmatmul.bf16.gmra.mxu0 %v535
        %v546 = vpop.f32.mrf.mxu0
        %v547 = vadd.f32 %v519, %v546
        %v548 = vpop.f32.mrf.mxu0
        %549 = vdwg.mxu0
        %v550 = vxor.u32 %v547, 2147483648
        %v551 = vmul.f32 %v550, 1.442695
        %v552 = vpow.pop %v551
        %v553 = vadd.f32 %v552, 1.0
        %v554 = vrcp.pop %v553
        %v555 = vmul.f32 %v553, %v554
        %v556 = vsub.f32 1.0, %v555
        %v557 = vmul.f32 %v554, %v556
        %v558 = vadd.f32 %v554, %v557
        %vm559 = vweird.f32 %v553
        %vm560 = vweird.f32 %v554
        %vm561 = vmor %vm559, %vm560
        %v562 = vsel %vm561, %v554, %v558
        %v563 = vand.u32 2147483647, %v553
        %vm564 = vcmp.eq.f32.partialorder %v563, 8.507059e+37
        %v565 = vand.u32 %v553, 2147483648
        %v566 = vor.u32 1.1754944e-38, %v565
        %v567 = vsel %vm564, %v566, %v562
        %v568 = vmul.f32 1.0, %v567
        %v569 = vmul.f32 %v547, %v568
        %v570 = vld [vmem:[%s443] sm:$0x1]
        %v572 = vperm.slane %v570, 0
        %v574 = vmul.f32 %v569, %v572
        %v575 = vld [vmem:[%s449] sm:$0x1]
        %v577 = vperm.slane %v575, 0
        %v579 = vadd.f32 %v574, %v577
        %v580 = vpack.c.bf16 %v579, %v579
        %v581 = vld [vmem:[%s461] sm:$0xf]
        %v582 = vld [vmem:[%s461 + $0x4] sm:$0xf]
        %v583 = vld [vmem:[%s461 + $0x8] sm:$0xf]
        %v584 = vld [vmem:[%s461 + $0xc] sm:$0xf]
        %v585 = vld [vmem:[%s461 + $0x10] sm:$0xf]
        %v586 = vld [vmem:[%s461 + $0x14] sm:$0xf]
        %v587 = vld [vmem:[%s461 + $0x18] sm:$0xf]
        %v588 = vld [vmem:[%s461 + $0x1c] sm:$0xf]
        %v589 = vld [vmem:[%s461 + $0x20] sm:$0xf]
        %v590 = vld [vmem:[%s461 + $0x24] sm:$0xf]
        %v591 = vld [vmem:[%s461 + $0x28] sm:$0xf]
        %v592 = vld [vmem:[%s461 + $0x2c] sm:$0xf]
        %v593 = vld [vmem:[%s461 + $0x30] sm:$0xf]
        %v594 = vld [vmem:[%s461 + $0x34] sm:$0xf]
        %v595 = vld [vmem:[%s461 + $0x38] sm:$0xf]
        %v596 = vld [vmem:[%s461 + $0x3c] sm:$0xf]
        %v613 = vunpack.c.l.b16 %v581
        %v614 = vunpack.c.l.b16 %v582
        %v615 = vunpack.c.l.b16 %v583
        %v616 = vunpack.c.l.b16 %v584
        %v617 = vunpack.c.l.b16 %v585
        %v618 = vunpack.c.l.b16 %v586
        %v619 = vunpack.c.l.b16 %v587
        %v620 = vunpack.c.l.b16 %v588
        %v621 = vunpack.c.l.b16 %v589
        %v622 = vunpack.c.l.b16 %v590
        %v623 = vunpack.c.l.b16 %v591
        %v624 = vunpack.c.l.b16 %v592
        %v625 = vunpack.c.l.b16 %v593
        %v626 = vunpack.c.l.b16 %v594
        %v627 = vunpack.c.l.b16 %v595
        %v628 = vunpack.c.l.b16 %v596
        %v629 = vpack.c.b16 %v614, %v613
        %v630 = vpack.c.b16 %v616, %v615
        %v631 = vpack.c.b16 %v618, %v617
        %v632 = vpack.c.b16 %v620, %v619
        %v633 = vpack.c.b16 %v622, %v621
        %v634 = vpack.c.b16 %v624, %v623
        %v635 = vpack.c.b16 %v626, %v625
        %v636 = vpack.c.b16 %v628, %v627
        %645 = vmatpush.bf16.msra.mxu0 %v636
        %646 = vmatpush.bf16.msra.mxu0 %v635
        %647 = vmatpush.bf16.msra.mxu0 %v634
        %648 = vmatpush.bf16.msra.mxu0 %v633
        %649 = vmatpush.bf16.msra.mxu0 %v632
        %650 = vmatpush.bf16.msra.mxu0 %v631
        %651 = vmatpush.bf16.msra.mxu0 %v630
        %652 = vmatpush.bf16.msra.mxu0 %v629
        %653 = vmatmul.bf16.gmra.mxu0 %v580
        %v654 = vpop.f32.mrf.mxu0
        %v655 = vadd.f32 0.0, %v654
        %v656 = vpop.f32.mrf.mxu0
        %657 = vdwg.mxu0
        // Predicated region
        $region61: #{tpu_custom_call.1} parent=55 // pred_check
          %p658 = pneg %p464
        $region62: #{tpu_custom_call.1} parent=55 // pred_check_branch
          %660 = sbr.rel (%p658) target = $region64
        $region63: #{tpu_custom_call.1} parent=55 // pred_region
          %661 = vst.msk [vmem:[#allocation3] sm:$0xff] %vm533, %v655
        $region64: #{tpu_custom_call.1} parent=55 // pred_fallthru
          _
        %p662 = scmp.gt.s32.totalorder %s30, 0
        // Predicated region
        $region65: #{tpu_custom_call.1} parent=55 // pred_check
          %p663 = pneg %p662
        $region66: #{tpu_custom_call.1} parent=55 // pred_check_branch
          %665 = sbr.rel (%p663) target = $region68
        $region67: #{tpu_custom_call.1} parent=55 // pred_region
          %v666 = vld [vmem:[#allocation3] sm:$0xff]
          %v667 = vadd.f32 %v666, %v655
          %668 = vst.msk [vmem:[#allocation3] sm:$0xff] %vm533, %v667
        $region68: #{tpu_custom_call.1} parent=55 // pred_fallthru
          _
        // Predicated region
        $region69: #{tpu_custom_call.1} parent=55 // pred_check
          %p669 = pneg %p464
        $region70: #{tpu_custom_call.1} parent=55 // pred_check_branch
          %671 = sbr.rel (%p669) target = $region72
        $region71: #{tpu_custom_call.1} parent=55 // pred_region
          %v672 = vld [vmem:[#allocation3] sm:$0xff]
          %v673 = vld [vmem:[%s8] sm:$0x1]
          %v675 = vperm.slane %v673, 0
          %v677 = vadd.f32 %v672, %v675
          %678 = vst.msk [vmem:[%s430] sm:$0xff] %vm533, %v677
        $region72: #{tpu_custom_call.1} parent=55 // pred_fallthru
          _
        %s679 = sand.u32 %s277, 1
        %s680 = scalar_lea.sflag [#allocation5], %s679
        %s681 = sand.u32 %s277, 1
        %s682 = smul.addr %s681, 8
        %s683 = scalar_lea.vmem [#allocation4], %s682
        // Predicated region
        $region73: #{tpu_custom_call.1} parent=55 // pred_check
          %p684 = pneg %p287
        $region74: #{tpu_custom_call.1} parent=55 // pred_check_branch
          %686 = sbr.rel (%p684) target = $region76
        $region75: #{tpu_custom_call.1} parent=55 // pred_region
          %688 = vsyncadd %s680, 0
          %s689 = sadd.s32 %s29, %s28
          %s690 = smul.addr %s689, 8
          %s691 = scalar_lea.hbm %s9, %s690
          %s693 = sshll.u32 %s683, 4
          %s694 = int_to_ptr.vmem [resolvable:$true] %s693
          %s695 = sshll.u32 %s691, 4
          %s696 = int_to_ptr.hbm [resolvable:$true] %s695
          %698 = dma.vmem_to_hbm [thread:$0]  %s694, 128, %s696, %s680
        $region76: #{tpu_custom_call.1} parent=55 // pred_fallthru
          _
      $region56: #{tpu_custom_call.1} parent=5 // pred_fallthru
        _
      %p699 = scmp.le.s32.totalorder 2, %s18
      // Predicated region
      $region77: #{tpu_custom_call.1} parent=5 // pred_check
        %p700 = pneg %p699
      $region78: #{tpu_custom_call.1} parent=5 // pred_check_branch
        %702 = sbr.rel (%p700) target = $region80
      $region79: #{tpu_custom_call.1} parent=5 // pred_region
        %s703 = ssub.s32 %s18, 2
        // Predicated region
        $region81: #{tpu_custom_call.1} parent=79 // pred_check
          %p704 = pneg %p293
        $region82: #{tpu_custom_call.1} parent=79 // pred_check_branch
          %706 = sbr.rel (%p704) target = $region84
        $region83: #{tpu_custom_call.1} parent=79 // pred_region
          %s707 = sand.u32 %s278, 1
          %s708 = scalar_lea.sflag [#allocation5], %s707
          %s709 = sand.u32 %s278, 1
          %s710 = smul.addr %s709, 8
          %s711 = scalar_lea.vmem [#allocation4], %s710
          %713 = dma.done %s708, 128
        $region84: #{tpu_custom_call.1} parent=79 // pred_fallthru
          _
      $region80: #{tpu_custom_call.1} parent=5 // pred_fallthru
        _
    $region6: #{tpu_custom_call.1} parent=1 // loop_footer
      %s22 = sadd.s32 1, %s18
    $region7: #{tpu_custom_call.1} parent=1 // loop_footer_branch
      %17 = sbr.rel target = $region3
    $region8: #{tpu_custom_call.1} parent=1 // loop_exit
      _
    %714 = vsyncpa [#allocation5], 1
    %s715 = scalar_lea.sflag [#allocation5], 1
    %716 = vsyncpa %s715, 1

</llo_original>
